<compile_context>
chip_gen: v6e
topology: v6e:2x2x1
jax: 0.10.0
libtpu: 0.0.40
codegen_flags: <defaults>
</compile_context>

<pallas_src>
import functools

import jax
import jax.numpy as jnp
from jax.experimental import pallas as pl
from jax.experimental.pallas import tpu as pltpu


# ---------------------------------------------------------------------------
# Pallas kernels
# ---------------------------------------------------------------------------

def _fused_linear_kernel(*refs, ln, activation, residual):
    """(optional LN) -> matmul(bf16 operands, f32 acc) -> +bias -> act -> +res."""
    if residual:
        x_ref, r_ref, w_ref, b_ref, o_ref = refs
    else:
        x_ref, w_ref, b_ref, o_ref = refs
    x = x_ref[...].astype(jnp.float32)
    if ln:
        mu = jnp.mean(x, axis=-1, keepdims=True)
        var = jnp.mean((x - mu) ** 2, axis=-1, keepdims=True)
        x = (x - mu) * jax.lax.rsqrt(var + 1e-5)
    acc = jnp.dot(x.astype(jnp.bfloat16), w_ref[...].astype(jnp.bfloat16),
                  preferred_element_type=jnp.float32)
    acc = acc + b_ref[...].astype(jnp.float32)
    if activation == "relu":
        acc = jnp.maximum(acc, 0.0)
    elif activation == "sigmoid":
        acc = jax.nn.sigmoid(acc)
    if residual:
        acc = acc + r_ref[...].astype(jnp.float32)
    o_ref[...] = acc.astype(o_ref.dtype)


def fused_linear(x, p, *, ln=False, activation="none", residual=None):
    """Apply fused (LN+)Linear(+act)(+residual) over the last axis of x."""
    lead = x.shape[:-1]
    K = x.shape[-1]
    Nout = p["w"].shape[-1]
    x2 = x.reshape(-1, K)
    M = x2.shape[0]
    TM = M if M <= 512 else 512                       # TM==M (full) or mult. of 8
    grid = (pl.cdiv(M, TM),)
    b2 = p["b"].reshape(1, Nout)

    in_specs = [pl.BlockSpec((TM, K), lambda i: (i, 0))]
    args = [x2]
    if residual is not None:
        in_specs.append(pl.BlockSpec((TM, Nout), lambda i: (i, 0)))
        args.append(residual.reshape(-1, Nout))
    in_specs += [pl.BlockSpec((K, Nout), lambda i: (0, 0)),
                 pl.BlockSpec((1, Nout), lambda i: (0, 0))]
    args += [p["w"], b2]

    out = pl.pallas_call(
        functools.partial(_fused_linear_kernel, ln=ln, activation=activation,
                          residual=residual is not None),
        out_shape=jax.ShapeDtypeStruct((M, Nout), jnp.float32),
        grid=grid,
        in_specs=in_specs,
        out_specs=pl.BlockSpec((TM, Nout), lambda i: (i, 0)),
        compiler_params=pltpu.CompilerParams(dimension_semantics=("parallel",)),
    )(*args)
    return out.reshape(*lead, Nout)


def _mha_bias_kernel(qkv_ref, b_ref, o_ref, *, scale, n_heads, d_head):
    """Row attention with pair bias for a block of TR MSA rows.

    qkv_ref: [1, TR, L, 3*H*dh]   (fused q|k|v projection, no JAX transpose)
    b_ref  : [1, H, L, L]         (per-batch pair bias, shared by all rows)
    o_ref  : [1, TR, L, H*dh]
    """
    H, dh = n_heads, d_head
    qkv = qkv_ref[0].astype(jnp.float32)            # [TR, L, 3*H*dh]
    outs = []
    for h in range(H):                              # static unroll over heads
        q = qkv[:, :, h * dh:(h + 1) * dh] * scale  # scale folded into q
        k = qkv[:, :, H * dh + h * dh: H * dh + (h + 1) * dh]
        v = qkv[:, :, 2 * H * dh + h * dh: 2 * H * dh + (h + 1) * dh]
        s = jax.lax.dot_general(                    # [TR, L, L]
            q.astype(jnp.bfloat16), k.astype(jnp.bfloat16),
            (((2,), (2,)), ((0,), (0,))),
            preferred_element_type=jnp.float32)
        s = s + b_ref[0, h][None].astype(jnp.float32)
        m = jnp.max(s, axis=-1, keepdims=True)
        p = jnp.exp(s - m)
        denom = jnp.sum(p, axis=-1, keepdims=True)
        o_h = jax.lax.dot_general(                  # [TR, L, dh]
            p.astype(jnp.bfloat16), v.astype(jnp.bfloat16),
            (((2,), (1,)), ((0,), (0,))),
            preferred_element_type=jnp.float32)
        outs.append(o_h * pl.reciprocal(denom, approx=True))
    o_ref[0] = jnp.concatenate(outs, axis=-1).astype(o_ref.dtype)


def pallas_row_attention(qkv, bias, scale, n_heads, d_head):
    """qkv: [B, N, L, 3*H*dh], bias: [B, H, L, L] -> [B, N, L, H*dh].

    The bias block is indexed by batch only, so it is fetched once per batch
    and reused for every MSA-row block (no N-fold HBM broadcast).
    """
    # TODO(synk): for large L convert to key-blocked online-softmax (flash) form.
    B, N, L, _ = qkv.shape
    H, dh = n_heads, d_head
    TR = N if N <= 8 else 8                          # amortize grid-step overhead
    grid = (B, pl.cdiv(N, TR))
    return pl.pallas_call(
        functools.partial(_mha_bias_kernel, scale=scale, n_heads=H, d_head=dh),
        out_shape=jax.ShapeDtypeStruct((B, N, L, H * dh), jnp.float32),
        grid=grid,
        in_specs=[pl.BlockSpec((1, TR, L, 3 * H * dh), lambda b, r: (b, r, 0, 0)),
                  pl.BlockSpec((1, H, L, L), lambda b, r: (b, 0, 0, 0))],
        out_specs=pl.BlockSpec((1, TR, L, H * dh), lambda b, r: (b, r, 0, 0)),
        compiler_params=pltpu.CompilerParams(
            dimension_semantics=("parallel", "parallel")),
    )(qkv, bias)


def _opm_kernel(a_ref, b_ref, o_ref):
    """out[i, j] = sum_n a[n, i] * b[n, j]   (contraction over N, no transpose)."""
    a = a_ref[0].astype(jnp.bfloat16)               # [N, TI]
    bm = b_ref[0].astype(jnp.bfloat16)              # [N, TJ]
    o_ref[0] = jax.lax.dot_general(
        a, bm, (((0,), (0,)), ((), ())),
        preferred_element_type=jnp.float32).astype(o_ref.dtype)


def pallas_outer_product_mean(a_f, b_f):
    """a_f, b_f: [B, N, L*c] (weights already folded into a_f) -> [B, L*c, L*c]."""
    B, N, Lc = a_f.shape
    TI = Lc if Lc <= 512 else 512                   # keeps blocks small for v7x VMEM
    grid = (B, pl.cdiv(Lc, TI), pl.cdiv(Lc, TI))
    return pl.pallas_call(
        _opm_kernel,
        out_shape=jax.ShapeDtypeStruct((B, Lc, Lc), jnp.float32),
        grid=grid,
        in_specs=[pl.BlockSpec((1, N, TI), lambda b, i, j: (b, 0, i)),
                  pl.BlockSpec((1, N, TI), lambda b, i, j: (b, 0, j))],
        out_specs=pl.BlockSpec((1, TI, TI), lambda b, i, j: (b, i, j)),
        compiler_params=pltpu.CompilerParams(
            dimension_semantics=("parallel", "parallel", "parallel")),
    )(a_f, b_f)


# ---------------------------------------------------------------------------
# Config & parameters
# ---------------------------------------------------------------------------

CFG = dict(
    n_alphabet=21, vocab=23, d_msa=32, d_pair=32,
    n_heads=4, d_head=8, c_opm=8, d_2d=32, d_esm=16,
    n_templ=2, d_t1d=8, d_t2d=8, n_bins=16, relpos_max=8,
    recycle_feats=("query", "pair"),
)


def init_params(key, cfg):
    keys = iter(jax.random.split(key, 64))

    def lin(k_in, k_out):
        w = jax.random.normal(next(keys), (k_in, k_out), jnp.float32) / jnp.sqrt(k_in)
        return dict(w=w, b=jnp.zeros((k_out,), jnp.float32))

    def emb(n, d):
        return jax.random.normal(next(keys), (n, d), jnp.float32) * 0.1

    H, dh = cfg["n_heads"], cfg["d_head"]
    p = {}
    p["emb"] = dict(
        msa_emb=emb(cfg["vocab"], cfg["d_msa"]),
        tok_emb=emb(cfg["vocab"], cfg["d_msa"]),
        prof=lin(cfg["vocab"], cfg["d_msa"]),
        seq_emb=emb(cfg["vocab"], cfg["d_pair"]),
        leftright=lin(cfg["d_pair"], 2 * cfg["d_pair"]),   # merged left|right
        relpos=emb(2 * cfg["relpos_max"] + 1, cfg["d_pair"]),
        rec_pair=lin(cfg["d_pair"], cfg["d_pair"]),
        rec_query=lin(cfg["d_msa"], cfg["d_msa"]),
    )
    p["tmpl"] = dict(
        t2d=lin(cfg["d_t2d"], cfg["d_pair"]),
        t1d=lin(cfg["d_t1d"], cfg["d_pair"]),
        gate=lin(cfg["d_msa"], cfg["d_pair"]),
    )
    p["msa"] = dict(
        qkv=lin(cfg["d_msa"], 3 * H * dh),
        bias=lin(cfg["d_pair"], H),
        out=lin(H * dh, cfg["d_msa"]),
        ffn1=lin(cfg["d_msa"], 2 * cfg["d_msa"]),
        ffn2=lin(2 * cfg["d_msa"], cfg["d_msa"]),
        opm_ab=lin(cfg["d_msa"], 2 * cfg["c_opm"]),        # merged opm_a|opm_b
        opm_out=lin(cfg["c_opm"] ** 2, cfg["d_2d"]),
        esm=lin(cfg["d_esm"], cfg["d_2d"]),
    )
    p["pair"] = dict(
        conv1=lin(cfg["d_2d"], cfg["d_2d"]),
        conv2=lin(cfg["d_2d"], cfg["d_2d"]),
        head=lin(cfg["d_2d"], cfg["n_bins"]),
    )
    return p


# ---------------------------------------------------------------------------
# Sub-modules (structure mirrors the PyTorch MainModel; the internals of the
# original sub-modules are unavailable, so faithful-in-shape simplifications
# are used — see TODO(synk) notes).
# ---------------------------------------------------------------------------

def layer_norm(x, eps=1e-5):
    mu = jnp.mean(x, axis=-1, keepdims=True)
    var = jnp.mean((x - mu) ** 2, axis=-1, keepdims=True)
    return (x - mu) * jax.lax.rsqrt(var + eps)


def embedding_module(p, MSA_encoding, seq_encoding, res_idxs, cluster_profile,
                     MSA_token, recycle_data, cfg):
    d_pair = cfg["d_pair"]
    # MSA track: token embeddings + cluster-profile projection (residual-fused).
    base = (jnp.take(p["msa_emb"], MSA_encoding, axis=0)
            + jnp.take(p["tok_emb"], MSA_token, axis=0))             # [B,N,L,d_msa]
    msa = fused_linear(cluster_profile, p["prof"], residual=base)
    # Pair track: single merged left|right projection, then outer sum.
    q = jnp.take(p["seq_emb"], seq_encoding, axis=0)                  # [B,L,d_pair]
    lr = fused_linear(q, p["leftright"])                              # [B,L,2*d_pair]
    left, right = lr[..., :d_pair], lr[..., d_pair:]
    pair = left[:, :, None, :] + right[:, None, :, :]                 # [B,L,L,d_pair]
    rmax = cfg["relpos_max"]
    d = jnp.clip(res_idxs[:, :, None] - res_idxs[:, None, :], -rmax, rmax) + rmax
    pair = pair + jnp.take(p["relpos"], d, axis=0)
    # Recycled features (LN + linear + residual fused in one kernel).
    if "pair_feat" in recycle_data:
        pair = fused_linear(recycle_data["pair_feat"], p["rec_pair"],
                            ln=True, residual=pair)
    if "query_feat" in recycle_data:
        upd = fused_linear(recycle_data["query_feat"], p["rec_query"], ln=True)
        msa = msa.at[:, 0].add(upd)
    return msa, pair


def template_emb(p, x_query, pair_feat, t1d, t2d, res_mask, template_mask, cfg):
    # TODO(synk): original TemplateAxialTransformer runs axial attention over
    # templates; replaced here by a masked, query-gated template projection.
    w = template_mask / (jnp.sum(template_mask, axis=1, keepdims=True) + 1e-3)  # [B,T]
    t2d_p = fused_linear(t2d, p["t2d"])                               # [B,T,L,L,d_pair]
    t2d_avg = jnp.einsum("bt,btijd->bijd", w, t2d_p)
    t1d_p = fused_linear(t1d, p["t1d"])                               # [B,T,L,d_pair]
    t1d_avg = jnp.einsum("bt,btid->bid", w, t1d_p)
    gate = fused_linear(x_query, p["gate"], activation="sigmoid")     # [B,L,d_pair]
    mask2d = (res_mask[:, :, None] * res_mask[:, None, :])[..., None]
    upd = (t2d_avg + t1d_avg[:, :, None, :] + t1d_avg[:, None, :, :]) * mask2d
    return pair_feat + upd * gate[:, :, None, :]


def msa_module(p, msa, seq_weight, MSA_encoding, res_mask, seq_mask,
               global_token, pair_feat, recycle_query, cfg):
    B, N, L, _ = msa.shape
    H, dh = cfg["n_heads"], cfg["d_head"]
    x = msa
    # Row-wise self-attention over residues with pair-bias.
    qkv = fused_linear(x, p["qkv"], ln=True)                          # [B,N,L,3*H*dh]
    bias = fused_linear(pair_feat, p["bias"], ln=True)                # [B,L,L,H]
    bias = jnp.transpose(bias, (0, 3, 1, 2))                          # [B,H,L,L]
    bias = bias + (res_mask - 1.0)[:, None, None, :] * 1e9            # mask keys
    o = pallas_row_attention(qkv, bias, 1.0 / (dh ** 0.5), H, dh)     # [B,N,L,H*dh]
    x = fused_linear(o, p["out"], residual=x)
    # Transition / FFN (LN+linear+relu fused; linear+residual fused).
    h = fused_linear(x, p["ffn1"], ln=True, activation="relu")
    x = fused_linear(h, p["ffn2"], residual=x)
    x = x * res_mask[:, None, :, None]
    if recycle_query:
        # TODO(synk): HybridAttn's exact stacking of recycled query feats is not
        # available; mirror the `x[:-1] / x[-1]` split with a tuple here.
        return (x, x[:, 0])
    return x


def msa_out_layer(p, x, seq_weight, MSA_encoding, seq_mask, ESM, cfg):
    if isinstance(x, tuple):
        x = x[0]
    B, N, L, _ = x.shape
    c = cfg["c_opm"]
    ab = fused_linear(x, p["opm_ab"], ln=True)                        # [B,N,L,2c]
    a, b_ = ab[..., :c], ab[..., c:]
    w = seq_weight * seq_mask                                         # [B,N]
    w = w / (jnp.sum(w, axis=1, keepdims=True) + 1e-3)
    a_f = (a * w[:, :, None, None]).reshape(B, N, L * c)              # no transpose
    b_f = b_.reshape(B, N, L * c)
    opm = pallas_outer_product_mean(a_f, b_f)                         # [B,L*c,L*c]
    opm = opm.reshape(B, L, c, L, c).transpose(0, 1, 3, 2, 4).reshape(B, L, L, c * c)
    feat = fused_linear(opm, p["opm_out"])                            # [B,L,L,d_2d]
    esm_p = fused_linear(ESM, p["esm"])                               # [B,L,d_2d]
    feat = feat + esm_p[:, :, None, :] + esm_p[:, None, :, :]
    # feat_2D exposed channel-first ([B,C,L,L]) to mirror PyTorch NCHW convs.
    return jnp.transpose(feat, (0, 3, 1, 2))


def pair_module(p, feat_2D, res_mask, cfg):
    # TODO(synk): original PairModule conv kernel sizes unknown; 1x1 channel
    # mixing (matmul on MXU) is used.
    mask2d = res_mask[:, :, None] * res_mask[:, None, :]              # [B,L,L]
    x = jnp.transpose(feat_2D, (0, 2, 3, 1))                          # NHWC internally
    h = fused_linear(x, p["conv1"], ln=True, activation="relu")
    x = fused_linear(h, p["conv2"], residual=x)
    x = x * mask2d[..., None]
    logits = fused_linear(x, p["head"])                               # [B,L,L,n_bins]
    logits = 0.5 * (logits + jnp.transpose(logits, (0, 2, 1, 3)))     # symmetrize
    pair_out = jnp.transpose(logits, (0, 3, 1, 2))                    # [B,n_bins,L,L]
    feat_out = jnp.transpose(x, (0, 3, 1, 2))                         # [B,C,L,L]
    return pair_out, feat_out


# ---------------------------------------------------------------------------
# MainModel.forward
# ---------------------------------------------------------------------------

def main_model_forward(params, data, cfg):
    seq_encoding = data["seq_encoding"]
    MSA_encoding = data["MSA_encoding"]
    seq_weight = data["seq_weight"]
    res_idxs = data["res_idxs"]
    ESM = data["ESM"]
    MSA_token = data["MSA_token"]
    cluster_profile = data["cluster_profile"]
    recycling = data["recycling"]
    recycle_data = data["recycle_data"]
    template_feat1d = data["template_feat1d"]
    template_feat2d = data["template_feat2d"]
    template_mask = data["template_mask"]

    res_mask = jnp.where(seq_encoding < cfg["n_alphabet"], 1.0, 0.0)  # [B,L]
    seq_mask = jnp.where(seq_weight > 0, 1.0, 0.0)                    # [B,N]

    MSA_feat, pair_feat = embedding_module(
        params["emb"], MSA_encoding, seq_encoding, res_idxs,
        cluster_profile, MSA_token, recycle_data, cfg)

    global_token = None
    new_recycle_data = {}
    recycle_query = 1 if ("query" in cfg["recycle_feats"] and recycling) else 0
    recycle_pair = 1 if ("pair" in cfg["recycle_feats"] and recycling) else 0

    x_query = MSA_feat[:, 0, :, :]
    pair_feat = template_emb(params["tmpl"], x_query, pair_feat,
                             template_feat1d, template_feat2d,
                             res_mask, template_mask, cfg)

    x = msa_module(params["msa"], MSA_feat, seq_weight, MSA_encoding,
                   res_mask, seq_mask, global_token, pair_feat,
                   recycle_query, cfg)
    if recycle_query:
        x, qf = x[:-1], x[-1]
        new_recycle_data["query_feat"] = jax.lax.stop_gradient(qf)

    feat_2D = msa_out_layer(params["msa"], x, seq_weight, MSA_encoding,
                            seq_mask, ESM, cfg)
    pair_module_out, feat_2D = pair_module(params["pair"], feat_2D, res_mask, cfg)
    feat_2D = jnp.transpose(feat_2D, (0, 2, 3, 1))                    # NCHW -> NHWC
    if recycle_pair:
        new_recycle_data["pair_feat"] = jax.lax.stop_gradient(feat_2D)
    return pair_module_out, new_recycle_data


# ---------------------------------------------------------------------------
# Demo
# ---------------------------------------------------------------------------

if __name__ == "__main__":
    cfg = CFG
    key = jax.random.PRNGKey(0)
    kp, kd = jax.random.split(key)
    params = init_params(kp, cfg)

    B, N, L, T = 2, 4, 16, cfg["n_templ"]
    ks = jax.random.split(kd, 8)
    data = dict(
        seq_encoding=jax.random.randint(ks[0], (B, L), 0, cfg["vocab"]),
        MSA_encoding=jax.random.randint(ks[1], (B, N, L), 0, cfg["vocab"]),
        seq_weight=jnp.abs(jax.random.normal(ks[2], (B, N))) + 0.1,
        res_idxs=jnp.broadcast_to(jnp.arange(L, dtype=jnp.int32), (B, L)),
        ESM=jax.random.normal(ks[3], (B, L, cfg["d_esm"])),
        MSA_token=jax.random.randint(ks[4], (B, N, L), 0, cfg["vocab"]),
        cluster_profile=jax.nn.softmax(
            jax.random.normal(ks[5], (B, N, L, cfg["vocab"])), axis=-1),
        recycling=True,
        recycle_data={},   # first recycling iteration
        template_feat1d=jax.random.normal(ks[6], (B, T, L, cfg["d_t1d"])),
        template_feat2d=jax.random.normal(ks[7], (B, T, L, L, cfg["d_t2d"])),
        template_mask=jnp.ones((B, T), jnp.float32),
    )

    pair_out, new_rec = main_model_forward(params, data, cfg)
    jax.block_until_ready((pair_out, new_rec))
    assert pair_out.shape == (B, cfg["n_bins"], L, L)
    assert new_rec["pair_feat"].shape == (B, L, L, cfg["d_2d"])
    assert new_rec["query_feat"].shape == (B, L, cfg["d_msa"])
    print("KERNEL_OK")
</pallas_src>

<mosaic_0001>
module attributes {stable_mosaic.version = 11 : i64} {
  func.func @_fused_linear_kernel(%arg0: i32, %arg1: memref<128x23xf32, #tpu.memory_space<vmem>>, %arg2: memref<128x32xf32, #tpu.memory_space<vmem>>, %arg3: memref<23x32xf32, #tpu.memory_space<vmem>>, %arg4: memref<1x32xf32, #tpu.memory_space<vmem>>, %arg5: memref<128x32xf32, #tpu.memory_space<vmem>>) attributes {dimension_semantics = [#tpu.dimension_semantics<parallel>], iteration_bounds = array<i64: 1>, scalar_prefetch = 0 : i64, scratch_operands = 0 : i64, tpu.core_type = #tpu.core_type<tc>, window_params = [{transform_indices = @transform_0, window_bounds = array<i64: 128, 23>}, {transform_indices = @transform_1, window_bounds = array<i64: 128, 32>}, {pipeline_mode = #tpu.pipeline_mode<synchronous>, transform_indices = @transform_2, window_bounds = array<i64: 23, 32>}, {pipeline_mode = #tpu.pipeline_mode<synchronous>, transform_indices = @transform_3, window_bounds = array<i64: 1, 32>}, {transform_indices = @transform_4, window_bounds = array<i64: 128, 32>}]} {
    %c0 = arith.constant 0 : index
    %c0_0 = arith.constant 0 : index
    %0 = vector.load %arg1[%c0, %c0_0] : memref<128x23xf32, #tpu.memory_space<vmem>>, vector<128x23xf32>
    %1 = arith.truncf %0 : vector<128x23xf32> to vector<128x23xbf16>
    %c0_1 = arith.constant 0 : index
    %c0_2 = arith.constant 0 : index
    %2 = vector.load %arg3[%c0_1, %c0_2] : memref<23x32xf32, #tpu.memory_space<vmem>>, vector<23x32xf32>
    %3 = arith.truncf %2 : vector<23x32xf32> to vector<23x32xbf16>
    %cst = arith.constant dense<0.000000e+00> : vector<128x32xf32>
    %4 = tpu.matmul %1, %3, %cst {dimension_numbers = #tpu.dot_dimension_numbers<[1], [0], [0], [1], [0, 0, 1, 1], [], []>} : vector<128x23xbf16>, vector<23x32xbf16>, vector<128x32xf32> -> vector<128x32xf32>
    %c0_3 = arith.constant 0 : index
    %c0_4 = arith.constant 0 : index
    %5 = vector.load %arg4[%c0_3, %c0_4] : memref<1x32xf32, #tpu.memory_space<vmem>>, vector<1x32xf32>
    %6 = vector.broadcast %5 : vector<1x32xf32> to vector<128x32xf32>
    %7 = arith.addf %4, %6 : vector<128x32xf32>
    %c0_5 = arith.constant 0 : index
    %c0_6 = arith.constant 0 : index
    %8 = vector.load %arg2[%c0_5, %c0_6] : memref<128x32xf32, #tpu.memory_space<vmem>>, vector<128x32xf32>
    %9 = arith.addf %7, %8 : vector<128x32xf32>
    %c0_7 = arith.constant 0 : index
    %c0_8 = arith.constant 0 : index
    %10 = vector.load %arg5[%c0_7, %c0_8] : memref<128x32xf32, #tpu.memory_space<vmem>>, vector<128x32xf32>
    tpu.vector_store %arg5[%c0_7, %c0_8], %9 {strides = array<i32>} : memref<128x32xf32, #tpu.memory_space<vmem>>, vector<128x32xf32>,
    return
  }
  func.func @transform_0(%arg0: i32) -> (i32, i32) {
    %c0_i32 = arith.constant 0 : i32
    %c0_i32_0 = arith.constant 0 : i32
    return %arg0, %c0_i32 : i32, i32
  }
  func.func @transform_1(%arg0: i32) -> (i32, i32) {
    %c0_i32 = arith.constant 0 : i32
    %c0_i32_0 = arith.constant 0 : i32
    return %arg0, %c0_i32 : i32, i32
  }
  func.func @transform_2(%arg0: i32) -> (i32, i32) {
    %c0_i32 = arith.constant 0 : i32
    %c0_i32_0 = arith.constant 0 : i32
    %c0_i32_1 = arith.constant 0 : i32
    return %c0_i32, %c0_i32_0 : i32, i32
  }
  func.func @transform_3(%arg0: i32) -> (i32, i32) {
    %c0_i32 = arith.constant 0 : i32
    %c0_i32_0 = arith.constant 0 : i32
    %c0_i32_1 = arith.constant 0 : i32
    return %c0_i32, %c0_i32_0 : i32, i32
  }
  func.func @transform_4(%arg0: i32) -> (i32, i32) {
    %c0_i32 = arith.constant 0 : i32
    %c0_i32_0 = arith.constant 0 : i32
    return %arg0, %c0_i32 : i32, i32
  }
}

</mosaic_0001>

<llo_original>
// kernel: tpu_custom_call.1
$region0: #{tpu_custom_call.1}
  #allocation0 [shape = 'u32[]', space=smem, size = 0x4, offset = 0x4, fixed_abs, tag = 'smem constant byte address 0x4 - core index']
  #allocation1 [shape = 'u32[144,128]{1,0:T(1,128)}', space=vmem, size = 0x12000, scoped, tag = 'internal scratch']
  %s0 = inlined_call_operand.vmem [shape: f32[128,23], index: 0, kind: input, shape index: {}]
  %s1 = inlined_call_operand.vmem [shape: f32[128,32], index: 1, kind: input, shape index: {}]
  %s2 = inlined_call_operand.vmem [shape: f32[23,32], index: 2, kind: input, shape index: {}]
  %s3 = inlined_call_operand.vmem [shape: f32[1,32], index: 3, kind: input, shape index: {}]
  %s4 = inlined_call_operand.vmem [shape: f32[128,32], index: 4, kind: output, shape index: {}]
  %s5 = sld [smem:[#allocation0]]
  $region26: #{tpu_custom_call.1} parent=0
    _
  %s7 = ssub.s32 1, %s5
  %s8 = scalar_select 0, %s7, %s5
  // Predicated region
  $region2: #{tpu_custom_call.1} parent=0 // pred_check
    _
  $region3: #{tpu_custom_call.1} parent=0 // pred_check_branch
    %10 = sbr.rel (0) target = $region5
  $region4: #{tpu_custom_call.1} parent=0 // pred_region
    _
  $region5: #{tpu_custom_call.1} parent=0 // pred_fallthru
    _
  // Predicated region
  $region6: #{tpu_custom_call.1} parent=0 // pred_check
    _
  $region7: #{tpu_custom_call.1} parent=0 // pred_check_branch
    %12 = sbr.rel (0) target = $region9
  $region8: #{tpu_custom_call.1} parent=0 // pred_region
    _
  $region9: #{tpu_custom_call.1} parent=0 // pred_fallthru
    _
  // Predicated region
  $region10: #{tpu_custom_call.1} parent=0 // pred_check
    _
  $region11: #{tpu_custom_call.1} parent=0 // pred_check_branch
    %14 = sbr.rel (0) target = $region13
  $region12: #{tpu_custom_call.1} parent=0 // pred_region
    _
  $region13: #{tpu_custom_call.1} parent=0 // pred_fallthru
    _
  // Predicated region
  $region14: #{tpu_custom_call.1} parent=0 // pred_check
    _
  $region15: #{tpu_custom_call.1} parent=0 // pred_check_branch
    %16 = sbr.rel (0) target = $region17
  $region16: #{tpu_custom_call.1} parent=0 // pred_region
    _
  $region17: #{tpu_custom_call.1} parent=0 // pred_fallthru
    _
  %v18 = vld [vmem:[%s0] sm:$0xff]
  %v19 = vld [vmem:[%s0 + $0x8] sm:$0xff]
  %v20 = vld [vmem:[%s0 + $0x10] sm:$0xff]
  %v21 = vld [vmem:[%s0 + $0x18] sm:$0xff]
  %v22 = vld [vmem:[%s0 + $0x20] sm:$0xff]
  %v23 = vld [vmem:[%s0 + $0x28] sm:$0xff]
  %v24 = vld [vmem:[%s0 + $0x30] sm:$0xff]
  %v25 = vld [vmem:[%s0 + $0x38] sm:$0xff]
  %v26 = vld [vmem:[%s0 + $0x40] sm:$0xff]
  %v27 = vld [vmem:[%s0 + $0x48] sm:$0xff]
  %v28 = vld [vmem:[%s0 + $0x50] sm:$0xff]
  %v29 = vld [vmem:[%s0 + $0x58] sm:$0xff]
  %v30 = vld [vmem:[%s0 + $0x60] sm:$0xff]
  %v31 = vld [vmem:[%s0 + $0x68] sm:$0xff]
  %v32 = vld [vmem:[%s0 + $0x70] sm:$0xff]
  %v33 = vld [vmem:[%s0 + $0x78] sm:$0xff]
  %v34 = vpack.c.bf16 %v19, %v18
  %v35 = vpack.c.bf16 %v21, %v20
  %v36 = vpack.c.bf16 %v23, %v22
  %v37 = vpack.c.bf16 %v25, %v24
  %v38 = vpack.c.bf16 %v27, %v26
  %v39 = vpack.c.bf16 %v29, %v28
  %v40 = vpack.c.bf16 %v31, %v30
  %v41 = vpack.c.bf16 %v33, %v32
  %v42 = vld [vmem:[%s2] sm:$0xff]
  %v43 = vld [vmem:[%s2 + $0x8] sm:$0xff]
  %v44 = vld [vmem:[%s2 + $0x10] sm:$0x7f]
  %v45 = vpack.c.bf16 %v43, %v42
  %v46 = vpack.c.bf16 %v44, %v44
  %v47 = vld [vmem:[%s3] sm:$0x1]
  %v49 = vlaneseq
  %v50 = vshrl.u32 %v49, 7
  %v51 = vsub.s32 0, %v50
  %v52 = vrot.slane %v47, %v51
  %vm54 = vcmask 187392
  %v56 = vsel %vm54, %v34, 0
  %v59 = vsel %vm54, %v35, 0
  %v62 = vsel %vm54, %v36, 0
  %v65 = vsel %vm54, %v37, 0
  %v68 = vsel %vm54, %v38, 0
  %v71 = vsel %vm54, %v39, 0
  %v74 = vsel %vm54, %v40, 0
  %v77 = vsel %vm54, %v41, 0
  %vm79 = vcmask 1042432
  %vm80 = vcmask 1043456
  %v81 = vsel %vm79, 4294967295, 65535
  %v82 = vsel %vm80, %v81, 0
  %v84 = vand.u32 %v46, %v82
  %86 = vmatprep.subr.bf16.mxu0 0
  %87 = vmatpush1.bf16.msra.mxu0 0
  %88 = vmatprep.subr.bf16.mxu0 0
  %89 = vmatpush1.bf16.msra.mxu0 0
  %90 = vmatprep.subr.bf16.mxu0 0
  %91 = vmatpush1.bf16.msra.mxu0 0
  %92 = vmatprep.subr.bf16.mxu0 0
  %93 = vmatpush1.bf16.msra.mxu0 0
  %94 = vmatprep.subr.bf16.mxu0 0
  %95 = vmatpush1.bf16.msra.mxu0 0
  %96 = vmatprep.subr.bf16.mxu0 0
  %97 = vmatpush1.bf16.msra.mxu0 0
  %98 = vmatprep.subr.bf16.mxu0 0
  %99 = vmatpush1.bf16.msra.mxu0 %v84
  %100 = vmatprep.subr.bf16.mxu0 0
  %101 = vmatpush1.bf16.msra.mxu0 %v45
  %102 = vmatprep.subr.bf16.mxu0 0
  %103 = vmatpush2.bf16.msra.mxu0 0
  %104 = vmatprep.subr.bf16.mxu0 0
  %105 = vmatpush2.bf16.msra.mxu0 0
  %106 = vmatprep.subr.bf16.mxu0 0
  %107 = vmatpush2.bf16.msra.mxu0 0
  %108 = vmatprep.subr.bf16.mxu0 0
  %109 = vmatpush2.bf16.msra.mxu0 0
  %110 = vmatprep.subr.bf16.mxu0 0
  %111 = vmatpush2.bf16.msra.mxu0 0
  %112 = vmatprep.subr.bf16.mxu0 0
  %113 = vmatpush2.bf16.msra.mxu0 0
  %114 = vmatprep.subr.bf16.mxu0 0
  %115 = vmatpush2.bf16.msra.mxu0 0
  %116 = vmatprep.subr.bf16.mxu0 0
  %117 = vmatpush2.bf16.msra.mxu0 0
  %118 = vmatprep.mubr.bf16.mxu0 0
  %119 = vmatmul.mubr.bf16.gmra.mxu0 %v56
  %v120 = vpop.f32.mrf.mxu0
  %v121 = vadd.f32 %v52, %v120
  %v122 = vpop.f32.mrf.mxu0
  %v123 = vpop.f32.mrf.mxu0
  %v124 = vadd.f32 %v52, %v123
  %v125 = vpop.f32.mrf.mxu0
  %126 = vmatprep.mubr.bf16.mxu0 0
  %127 = vmatmul.mubr.bf16.gmra.mxu0 %v59
  %v128 = vpop.f32.mrf.mxu0
  %v129 = vadd.f32 %v52, %v128
  %v130 = vpop.f32.mrf.mxu0
  %v131 = vpop.f32.mrf.mxu0
  %v132 = vadd.f32 %v52, %v131
  %v133 = vpop.f32.mrf.mxu0
  %134 = vmatprep.mubr.bf16.mxu0 0
  %135 = vmatmul.mubr.bf16.gmra.mxu0 %v62
  %v136 = vpop.f32.mrf.mxu0
  %v137 = vadd.f32 %v52, %v136
  %v138 = vpop.f32.mrf.mxu0
  %v139 = vpop.f32.mrf.mxu0
  %v140 = vadd.f32 %v52, %v139
  %v141 = vpop.f32.mrf.mxu0
  %142 = vmatprep.mubr.bf16.mxu0 0
  %143 = vmatmul.mubr.bf16.gmra.mxu0 %v65
  %v144 = vpop.f32.mrf.mxu0
  %v145 = vadd.f32 %v52, %v144
  %v146 = vpop.f32.mrf.mxu0
  %v147 = vpop.f32.mrf.mxu0
  %v148 = vadd.f32 %v52, %v147
  %v149 = vpop.f32.mrf.mxu0
  %150 = vmatprep.mubr.bf16.mxu0 0
  %151 = vmatmul.mubr.bf16.gmra.mxu0 %v68
  %v152 = vpop.f32.mrf.mxu0
  %v153 = vadd.f32 %v52, %v152
  %v154 = vpop.f32.mrf.mxu0
  %v155 = vpop.f32.mrf.mxu0
  %v156 = vadd.f32 %v52, %v155
  %v157 = vpop.f32.mrf.mxu0
  %158 = vmatprep.mubr.bf16.mxu0 0
  %159 = vmatmul.mubr.bf16.gmra.mxu0 %v71
  %v160 = vpop.f32.mrf.mxu0
  %v161 = vadd.f32 %v52, %v160
  %v162 = vpop.f32.mrf.mxu0
  %v163 = vpop.f32.mrf.mxu0
  %v164 = vadd.f32 %v52, %v163
  %v165 = vpop.f32.mrf.mxu0
  %166 = vmatprep.mubr.bf16.mxu0 0
  %167 = vmatmul.mubr.bf16.gmra.mxu0 %v74
  %v168 = vpop.f32.mrf.mxu0
  %v169 = vadd.f32 %v52, %v168
  %v170 = vpop.f32.mrf.mxu0
  %v171 = vpop.f32.mrf.mxu0
  %v172 = vadd.f32 %v52, %v171
  %v173 = vpop.f32.mrf.mxu0
  %174 = vmatprep.mubr.bf16.mxu0 0
  %175 = vmatmul.mubr.bf16.gmra.mxu0 %v77
  %v176 = vpop.f32.mrf.mxu0
  %v177 = vadd.f32 %v52, %v176
  %v178 = vpop.f32.mrf.mxu0
  %v179 = vpop.f32.mrf.mxu0
  %v180 = vadd.f32 %v52, %v179
  %v181 = vpop.f32.mrf.mxu0
  %182 = vdwg.mxu0
  %v183 = vld [vmem:[%s1] sm:$0xff]
  %v184 = vld [vmem:[%s1 + $0x8] sm:$0xff]
  %v185 = vld [vmem:[%s1 + $0x10] sm:$0xff]
  %v186 = vld [vmem:[%s1 + $0x18] sm:$0xff]
  %v187 = vld [vmem:[%s1 + $0x20] sm:$0xff]
  %v188 = vld [vmem:[%s1 + $0x28] sm:$0xff]
  %v189 = vld [vmem:[%s1 + $0x30] sm:$0xff]
  %v190 = vld [vmem:[%s1 + $0x38] sm:$0xff]
  %v191 = vld [vmem:[%s1 + $0x40] sm:$0xff]
  %v192 = vld [vmem:[%s1 + $0x48] sm:$0xff]
  %v193 = vld [vmem:[%s1 + $0x50] sm:$0xff]
  %v194 = vld [vmem:[%s1 + $0x58] sm:$0xff]
  %v195 = vld [vmem:[%s1 + $0x60] sm:$0xff]
  %v196 = vld [vmem:[%s1 + $0x68] sm:$0xff]
  %v197 = vld [vmem:[%s1 + $0x70] sm:$0xff]
  %v198 = vld [vmem:[%s1 + $0x78] sm:$0xff]
  %v199 = vadd.f32 %v121, %v183
  %v200 = vadd.f32 %v124, %v184
  %v201 = vadd.f32 %v129, %v185
  %v202 = vadd.f32 %v132, %v186
  %v203 = vadd.f32 %v137, %v187
  %v204 = vadd.f32 %v140, %v188
  %v205 = vadd.f32 %v145, %v189
  %v206 = vadd.f32 %v148, %v190
  %v207 = vadd.f32 %v153, %v191
  %v208 = vadd.f32 %v156, %v192
  %v209 = vadd.f32 %v161, %v193
  %v210 = vadd.f32 %v164, %v194
  %v211 = vadd.f32 %v169, %v195
  %v212 = vadd.f32 %v172, %v196
  %v213 = vadd.f32 %v177, %v197
  %v214 = vadd.f32 %v180, %v198
  %vm215 = vcmask 261120
  %216 = vst.msk [vmem:[%s4] sm:$0xff] %vm215, %v199
  %217 = vst.msk [vmem:[%s4 + $0x8] sm:$0xff] %vm215, %v200
  %218 = vst.msk [vmem:[%s4 + $0x10] sm:$0xff] %vm215, %v201
  %219 = vst.msk [vmem:[%s4 + $0x18] sm:$0xff] %vm215, %v202
  %220 = vst.msk [vmem:[%s4 + $0x20] sm:$0xff] %vm215, %v203
  %221 = vst.msk [vmem:[%s4 + $0x28] sm:$0xff] %vm215, %v204
  %222 = vst.msk [vmem:[%s4 + $0x30] sm:$0xff] %vm215, %v205
  %223 = vst.msk [vmem:[%s4 + $0x38] sm:$0xff] %vm215, %v206
  %224 = vst.msk [vmem:[%s4 + $0x40] sm:$0xff] %vm215, %v207
  %225 = vst.msk [vmem:[%s4 + $0x48] sm:$0xff] %vm215, %v208
  %226 = vst.msk [vmem:[%s4 + $0x50] sm:$0xff] %vm215, %v209
  %227 = vst.msk [vmem:[%s4 + $0x58] sm:$0xff] %vm215, %v210
  %228 = vst.msk [vmem:[%s4 + $0x60] sm:$0xff] %vm215, %v211
  %229 = vst.msk [vmem:[%s4 + $0x68] sm:$0xff] %vm215, %v212
  %230 = vst.msk [vmem:[%s4 + $0x70] sm:$0xff] %vm215, %v213
  %231 = vst.msk [vmem:[%s4 + $0x78] sm:$0xff] %vm215, %v214
  // Predicated region
  $region18: #{tpu_custom_call.1} parent=0 // pred_check
    _
  $region19: #{tpu_custom_call.1} parent=0 // pred_check_branch
    %233 = sbr.rel (0) target = $region21
  $region20: #{tpu_custom_call.1} parent=0 // pred_region
    _
  $region21: #{tpu_custom_call.1} parent=0 // pred_fallthru
    _
  // Predicated region
  $region22: #{tpu_custom_call.1} parent=0 // pred_check
    _
  $region23: #{tpu_custom_call.1} parent=0 // pred_check_branch
    %235 = sbr.rel (0) target = $region25
  $region24: #{tpu_custom_call.1} parent=0 // pred_region
    _
  $region25: #{tpu_custom_call.1} parent=0 // pred_fallthru
    _

</llo_original>
